<compile_context>
chip_gen: v7x
topology: tpu7x:2x2x1
jax: 0.10.0
libtpu: 0.0.40
codegen_flags: <defaults>
</compile_context>

<pallas_src>
import functools

import jax
import jax.numpy as jnp
from jax.experimental import pallas as pl
from jax.experimental.pallas import tpu as pltpu

_EPS = 1e-5


def _basic_block_kernel(inv_m, x_ref, w1_ref, g1_ref, b1_ref, w2_ref, g2_ref,
                        b2_ref, kc_ref, out_ref, pad_ref, patch_ref):
    """conv3x3 -> BN -> ReLU -> conv3x3 -> BN -> (+ identity shortcut) -> ReLU.

    x_ref     : (N, H, L)    f32, L = W*C lane-dense input (also the shortcut)
    w*_ref    : (3*L, L)     bf16 block-banded im2col conv weights
    g*/b*_ref : (1, L)       f32 BN affine params tiled per lane (gamma[l % C])
    kc_ref    : (L, L)       f32 {0,1} channel-selector, kc[l,l'] = (l%C==l'%C)
    out_ref   : (N, H, L)    f32
    pad_ref   : (N, H+2, L)  f32 scratch; halo rows stay zero, reused by both convs
    patch_ref : (N*H, 3*L)   bf16 scratch im2col patch, reused by both convs
    """
    N, Hp, L = pad_ref.shape
    H = Hp - 2
    NH = N * H

    # Zero only the two H-halo rows, once; both convs reuse the same padded
    # scratch and only overwrite its interior rows afterwards.
    pad_ref[:, 0:1, :] = jnp.zeros((N, 1, L), jnp.float32)
    pad_ref[:, Hp - 1:Hp, :] = jnp.zeros((N, 1, L), jnp.float32)

    def conv(w_ref):
        # Only the 3 ky row-shifts are gathered (aligned 128-lane bf16 stores);
        # the kx shifts live in the block-banded weight matrix.
        for ky in range(3):
            rows = pad_ref[:, ky:ky + H, :].reshape(NH, L)
            patch_ref[:, ky * L:(ky + 1) * L] = rows.astype(jnp.bfloat16)
        # Single bf16 matmul per conv, K = 3*L, f32 accumulation on the MXU.
        return jnp.dot(patch_ref[...], w_ref[...],
                       preferred_element_type=jnp.float32)           # (NH, L) f32

    def batchnorm(acc, g_ref, b_ref):
        # Single-pass batch stats.  Reduce over rows first (cheap sublane
        # reduce), then one tiny (2, L) x (L, L) selector matmul sums the W
        # lane-groups of each channel and broadcasts the result back to every
        # lane of that channel -- no reshape / relayout, negligible MXU work.
        s = jnp.sum(acc, axis=0, keepdims=True)                      # (1, L)
        s2 = jnp.sum(acc * acc, axis=0, keepdims=True)               # (1, L)
        red = jnp.dot(jnp.concatenate([s, s2], axis=0), kc_ref[...],
                      preferred_element_type=jnp.float32) * inv_m    # (2, L)
        mean = red[0:1, :]
        var = red[1:2, :] - mean * mean          # biased var, PyTorch training mode
        scale = g_ref[...] * jax.lax.rsqrt(var + _EPS)               # (1, L)
        shift = b_ref[...] - mean * scale                            # (1, L)
        return acc * scale + shift                                   # one FMA slab

    # ---- conv1 -> bn1 -> relu ----
    pad_ref[:, 1:H + 1, :] = x_ref[...]
    y1 = jnp.maximum(batchnorm(conv(w1_ref), g1_ref, b1_ref), 0.0)

    # ---- conv2 -> bn2 -> (+ identity shortcut) -> relu ----
    pad_ref[:, 1:H + 1, :] = y1.reshape(N, H, L)     # halo rows are still zero
    y2 = batchnorm(conv(w2_ref), g2_ref, b2_ref)
    y2 = y2 + x_ref[...].reshape(NH, L)              # shortcut from the same VMEM copy
    out_ref[...] = jnp.maximum(y2, 0.0).reshape(N, H, L)


def _band_weights(w_oihw, W):
    """OIHW (Co, Ci, 3, 3) 3x3 conv weights -> (3*W*Ci, W*Co) bf16 block-banded
    im2col weight matrix.  Row-block ky handles the vertical tap; within each
    block the kx = 0/1/2 taps sit on the sub/main/super block diagonal, and the
    horizontal zero-padding falls out of eye(W, k) truncation."""
    Co, Ci, KH, KW = w_oihw.shape
    blocks = []
    for ky in range(KH):
        m = jnp.zeros((W * Ci, W * Co), jnp.float32)
        for kx in range(KW):
            dx = kx - 1
            tap = jnp.transpose(w_oihw[:, :, ky, kx]).astype(jnp.float32)  # (Ci, Co)
            m = m + jnp.kron(jnp.eye(W, k=-dx, dtype=jnp.float32), tap)
        blocks.append(m)
    return jnp.concatenate(blocks, axis=0).astype(jnp.bfloat16)


def basic_conv_block(x_nchw, w1, g1, b1, w2, g2, b2):
    """Forward of BasicConvBlock (stride=1, in==out -> identity shortcut).

    x_nchw : (N, C, H, W)       PyTorch layout
    w1, w2 : (Cout, Cin, 3, 3)  PyTorch OIHW conv weights (bias-free)
    g*, b* : (C,)               BatchNorm affine parameters
    Returns (N, C, H, W).
    """
    N, Cin, H, W = x_nchw.shape
    Cout = w1.shape[0]
    assert Cin == Cout, "demo covers the identity-shortcut configuration"
    C = Cin
    L = W * C
    assert L % 128 == 0, "demo sizes chosen so the pixel*channel slab is lane-dense"

    # Layout glue only (no jnp.pad HBM round trip, no duplicated shortcut array):
    x = jnp.transpose(x_nchw, (0, 2, 3, 1)).astype(jnp.float32).reshape(N, H, L)

    w1k = _band_weights(w1, W)                                     # (3L, L) bf16
    w2k = _band_weights(w2, W)
    g1t = jnp.tile(g1.astype(jnp.float32), W).reshape(1, L)        # gamma[l % C]
    b1t = jnp.tile(b1.astype(jnp.float32), W).reshape(1, L)
    g2t = jnp.tile(g2.astype(jnp.float32), W).reshape(1, L)
    b2t = jnp.tile(b2.astype(jnp.float32), W).reshape(1, L)

    # Precomputed {0,1} per-channel selector: kc[l, l'] = 1 iff (l%C)==(l'%C).
    li = jnp.arange(L).reshape(L, 1)
    lj = jnp.arange(L).reshape(1, L)
    kc = jnp.where((li % C) == (lj % C), 1.0, 0.0).astype(jnp.float32)

    inv_m = 1.0 / float(N * H * W)          # 1 / (N*H*W) for the batch statistics

    vmem = pl.BlockSpec(memory_space=pltpu.MemorySpace.VMEM)
    out = pl.pallas_call(
        functools.partial(_basic_block_kernel, inv_m),
        out_shape=jax.ShapeDtypeStruct((N, H, L), jnp.float32),
        in_specs=[vmem] * 8,
        out_specs=vmem,
        scratch_shapes=[
            pltpu.VMEM((N, H + 2, L), jnp.float32),      # padded activation (reused)
            pltpu.VMEM((N * H, 3 * L), jnp.bfloat16),    # im2col patch (reused)
        ],
    )(x, w1k, g1t, b1t, w2k, g2t, b2t, kc)

    return jnp.transpose(out.reshape(N, H, W, C), (0, 3, 1, 2))    # back to NCHW


def _reference(x, w1, g1, b1, w2, g2, b2):
    """Pure-JAX reference for PyTorch training-mode forward (NCHW).  The convs
    use bf16 operands with f32 accumulation to mirror the kernel's MXU-native
    path; BN, the shortcut add and ReLU stay in f32."""
    def conv(z, w):
        return jax.lax.conv_general_dilated(
            z.astype(jnp.bfloat16), w.astype(jnp.bfloat16),
            window_strides=(1, 1), padding=((1, 1), (1, 1)),
            dimension_numbers=("NCHW", "OIHW", "NCHW"),
            preferred_element_type=jnp.float32)

    def bn(z, g, b):
        mean = jnp.mean(z, axis=(0, 2, 3), keepdims=True)
        var = jnp.mean((z - mean) ** 2, axis=(0, 2, 3), keepdims=True)
        return (z - mean) * jax.lax.rsqrt(var + _EPS) * g.reshape(1, -1, 1, 1) \
            + b.reshape(1, -1, 1, 1)

    y = jax.nn.relu(bn(conv(x, w1), g1, b1))
    y = bn(conv(y, w2), g2, b2)
    return jax.nn.relu(y + x)


if __name__ == "__main__":
    N, C, H, W = 2, 8, 16, 16          # W*C = 128 -> lane-dense slabs
    key = jax.random.PRNGKey(0)
    ks = jax.random.split(key, 7)
    x = jax.random.normal(ks[0], (N, C, H, W), jnp.float32)
    w1 = 0.1 * jax.random.normal(ks[1], (C, C, 3, 3), jnp.float32)
    w2 = 0.1 * jax.random.normal(ks[2], (C, C, 3, 3), jnp.float32)
    g1 = 1.0 + 0.1 * jax.random.normal(ks[3], (C,), jnp.float32)
    b1 = 0.1 * jax.random.normal(ks[4], (C,), jnp.float32)
    g2 = 1.0 + 0.1 * jax.random.normal(ks[5], (C,), jnp.float32)
    b2 = 0.1 * jax.random.normal(ks[6], (C,), jnp.float32)

    out = basic_conv_block(x, w1, g1, b1, w2, g2, b2)
    out = jax.block_until_ready(out)

    ref = _reference(x, w1, g1, b1, w2, g2, b2)
    assert out.shape == ref.shape == (N, C, H, W)
    max_err = float(jnp.max(jnp.abs(out - ref)))
    assert jnp.allclose(out, ref, atol=5e-3, rtol=5e-3), max_err
    print("KERNEL_OK")
</pallas_src>

<mosaic_0001>
module attributes {stable_mosaic.version = 11 : i64} {
  func.func @_basic_block_kernel(%arg0: memref<2x16x128xf32, #tpu.memory_space<vmem>>, %arg1: memref<384x128xbf16, #tpu.memory_space<vmem>>, %arg2: memref<1x128xf32, #tpu.memory_space<vmem>>, %arg3: memref<1x128xf32, #tpu.memory_space<vmem>>, %arg4: memref<384x128xbf16, #tpu.memory_space<vmem>>, %arg5: memref<1x128xf32, #tpu.memory_space<vmem>>, %arg6: memref<1x128xf32, #tpu.memory_space<vmem>>, %arg7: memref<128x128xf32, #tpu.memory_space<vmem>>, %arg8: memref<2x16x128xf32, #tpu.memory_space<vmem>>, %arg9: memref<2x18x128xf32, #tpu.memory_space<vmem>>, %arg10: memref<32x384xbf16, #tpu.memory_space<vmem>>) attributes {dimension_semantics = [], scalar_prefetch = 0 : i64, scratch_operands = 2 : i64, tpu.core_type = #tpu.core_type<tc>} {
    %cst = arith.constant 0.000000e+00 : f32
    %0 = vector.broadcast %cst : f32 to vector<2x1x128xf32>
    %c0 = arith.constant 0 : index
    %c0_0 = arith.constant 0 : index
    %c0_1 = arith.constant 0 : index
    %1 = vector.load %arg9[%c0, %c0_0, %c0_1] : memref<2x18x128xf32, #tpu.memory_space<vmem>>, vector<2x1x128xf32>
    tpu.vector_store %arg9[%c0, %c0_0, %c0_1], %0 {strides = array<i32>} : memref<2x18x128xf32, #tpu.memory_space<vmem>>, vector<2x1x128xf32>,
    %cst_2 = arith.constant 0.000000e+00 : f32
    %2 = vector.broadcast %cst_2 : f32 to vector<2x1x128xf32>
    %c0_3 = arith.constant 0 : index
    %c17 = arith.constant 17 : index
    %c0_4 = arith.constant 0 : index
    %3 = vector.load %arg9[%c0_3, %c17, %c0_4] : memref<2x18x128xf32, #tpu.memory_space<vmem>>, vector<2x1x128xf32>
    tpu.vector_store %arg9[%c0_3, %c17, %c0_4], %2 {strides = array<i32>} : memref<2x18x128xf32, #tpu.memory_space<vmem>>, vector<2x1x128xf32>,
    %c0_5 = arith.constant 0 : index
    %c0_6 = arith.constant 0 : index
    %c0_7 = arith.constant 0 : index
    %4 = vector.load %arg0[%c0_5, %c0_6, %c0_7] : memref<2x16x128xf32, #tpu.memory_space<vmem>>, vector<2x16x128xf32>
    %c0_8 = arith.constant 0 : index
    %c1 = arith.constant 1 : index
    %c0_9 = arith.constant 0 : index
    %5 = vector.load %arg9[%c0_8, %c1, %c0_9] : memref<2x18x128xf32, #tpu.memory_space<vmem>>, vector<2x16x128xf32>
    tpu.vector_store %arg9[%c0_8, %c1, %c0_9], %4 {strides = array<i32>} : memref<2x18x128xf32, #tpu.memory_space<vmem>>, vector<2x16x128xf32>,
    %c0_10 = arith.constant 0 : index
    %c0_11 = arith.constant 0 : index
    %c0_12 = arith.constant 0 : index
    %6 = vector.load %arg9[%c0_10, %c0_11, %c0_12] : memref<2x18x128xf32, #tpu.memory_space<vmem>>, vector<2x16x128xf32>
    %7 = vector.shape_cast %6 : vector<2x16x128xf32> to vector<32x128xf32>
    %8 = arith.truncf %7 : vector<32x128xf32> to vector<32x128xbf16>
    %c0_13 = arith.constant 0 : index
    %c0_14 = arith.constant 0 : index
    %9 = vector.load %arg10[%c0_13, %c0_14] : memref<32x384xbf16, #tpu.memory_space<vmem>>, vector<32x128xbf16>
    tpu.vector_store %arg10[%c0_13, %c0_14], %8 {strides = array<i32>} : memref<32x384xbf16, #tpu.memory_space<vmem>>, vector<32x128xbf16>,
    %c0_15 = arith.constant 0 : index
    %c1_16 = arith.constant 1 : index
    %c0_17 = arith.constant 0 : index
    %10 = vector.load %arg9[%c0_15, %c1_16, %c0_17] : memref<2x18x128xf32, #tpu.memory_space<vmem>>, vector<2x16x128xf32>
    %11 = vector.shape_cast %10 : vector<2x16x128xf32> to vector<32x128xf32>
    %12 = arith.truncf %11 : vector<32x128xf32> to vector<32x128xbf16>
    %c0_18 = arith.constant 0 : index
    %c128 = arith.constant 128 : index
    %13 = vector.load %arg10[%c0_18, %c128] : memref<32x384xbf16, #tpu.memory_space<vmem>>, vector<32x128xbf16>
    tpu.vector_store %arg10[%c0_18, %c128], %12 {strides = array<i32>} : memref<32x384xbf16, #tpu.memory_space<vmem>>, vector<32x128xbf16>,
    %c0_19 = arith.constant 0 : index
    %c2 = arith.constant 2 : index
    %c0_20 = arith.constant 0 : index
    %14 = vector.load %arg9[%c0_19, %c2, %c0_20] : memref<2x18x128xf32, #tpu.memory_space<vmem>>, vector<2x16x128xf32>
    %15 = vector.shape_cast %14 : vector<2x16x128xf32> to vector<32x128xf32>
    %16 = arith.truncf %15 : vector<32x128xf32> to vector<32x128xbf16>
    %c0_21 = arith.constant 0 : index
    %c256 = arith.constant 256 : index
    %17 = vector.load %arg10[%c0_21, %c256] : memref<32x384xbf16, #tpu.memory_space<vmem>>, vector<32x128xbf16>
    tpu.vector_store %arg10[%c0_21, %c256], %16 {strides = array<i32>} : memref<32x384xbf16, #tpu.memory_space<vmem>>, vector<32x128xbf16>,
    %c0_22 = arith.constant 0 : index
    %c0_23 = arith.constant 0 : index
    %18 = vector.load %arg10[%c0_22, %c0_23] : memref<32x384xbf16, #tpu.memory_space<vmem>>, vector<32x384xbf16>
    %c0_24 = arith.constant 0 : index
    %c0_25 = arith.constant 0 : index
    %19 = vector.load %arg1[%c0_24, %c0_25] : memref<384x128xbf16, #tpu.memory_space<vmem>>, vector<384x128xbf16>
    %cst_26 = arith.constant dense<0.000000e+00> : vector<32x128xf32>
    %20 = tpu.matmul %18, %19, %cst_26 {dimension_numbers = #tpu.dot_dimension_numbers<[1], [0], [0], [1], [0, 0, 1, 1], [], []>} : vector<32x384xbf16>, vector<384x128xbf16>, vector<32x128xf32> -> vector<32x128xf32>
    %cst_27 = arith.constant dense<0.000000e+00> : vector<128xf32>
    %21 = vector.multi_reduction <add>, %20, %cst_27 [0] : vector<32x128xf32> to vector<128xf32>
    %22 = vector.shape_cast %21 : vector<128xf32> to vector<1x128xf32>
    %23 = arith.mulf %20, %20 : vector<32x128xf32>
    %cst_28 = arith.constant dense<0.000000e+00> : vector<128xf32>
    %24 = vector.multi_reduction <add>, %23, %cst_28 [0] : vector<32x128xf32> to vector<128xf32>
    %25 = vector.shape_cast %24 : vector<128xf32> to vector<1x128xf32>
    %26 = tpu.concatenate %22, %25 in 0 : vector<1x128xf32>, vector<1x128xf32> -> vector<2x128xf32>
    %c0_29 = arith.constant 0 : index
    %c0_30 = arith.constant 0 : index
    %27 = vector.load %arg7[%c0_29, %c0_30] : memref<128x128xf32, #tpu.memory_space<vmem>>, vector<128x128xf32>
    %cst_31 = arith.constant dense<0.000000e+00> : vector<2x128xf32>
    %28 = tpu.matmul %26, %27, %cst_31 {dimension_numbers = #tpu.dot_dimension_numbers<[1], [0], [0], [1], [0, 0, 1, 1], [], []>} : vector<2x128xf32>, vector<128x128xf32>, vector<2x128xf32> -> vector<2x128xf32>
    %cst_32 = arith.constant 0.001953125 : f32
    %29 = vector.broadcast %cst_32 : f32 to vector<2x128xf32>
    %30 = arith.mulf %28, %29 : vector<2x128xf32>
    %31 = vector.extract_strided_slice %30 {offsets = [0, 0], sizes = [1, 128], strides = [1, 1]} : vector<2x128xf32> to vector<1x128xf32>
    %32 = vector.extract_strided_slice %30 {offsets = [1, 0], sizes = [1, 128], strides = [1, 1]} : vector<2x128xf32> to vector<1x128xf32>
    %33 = arith.mulf %31, %31 : vector<1x128xf32>
    %34 = arith.subf %32, %33 : vector<1x128xf32>
    %c0_33 = arith.constant 0 : index
    %c0_34 = arith.constant 0 : index
    %35 = vector.load %arg2[%c0_33, %c0_34] : memref<1x128xf32, #tpu.memory_space<vmem>>, vector<1x128xf32>
    %cst_35 = arith.constant 9.99999974E-6 : f32
    %36 = vector.broadcast %cst_35 : f32 to vector<1x128xf32>
    %37 = arith.addf %34, %36 : vector<1x128xf32>
    %38 = math.rsqrt %37 : vector<1x128xf32>
    %39 = arith.mulf %35, %38 : vector<1x128xf32>
    %c0_36 = arith.constant 0 : index
    %c0_37 = arith.constant 0 : index
    %40 = vector.load %arg3[%c0_36, %c0_37] : memref<1x128xf32, #tpu.memory_space<vmem>>, vector<1x128xf32>
    %41 = arith.mulf %31, %39 : vector<1x128xf32>
    %42 = arith.subf %40, %41 : vector<1x128xf32>
    %43 = vector.broadcast %39 : vector<1x128xf32> to vector<32x128xf32>
    %44 = arith.mulf %20, %43 : vector<32x128xf32>
    %45 = vector.broadcast %42 : vector<1x128xf32> to vector<32x128xf32>
    %46 = arith.addf %44, %45 : vector<32x128xf32>
    %cst_38 = arith.constant 0.000000e+00 : f32
    %47 = vector.broadcast %cst_38 : f32 to vector<32x128xf32>
    %48 = arith.maximumf %46, %47 : vector<32x128xf32>
    %49 = vector.shape_cast %48 : vector<32x128xf32> to vector<2x16x128xf32>
    %c0_39 = arith.constant 0 : index
    %c1_40 = arith.constant 1 : index
    %c0_41 = arith.constant 0 : index
    %50 = vector.load %arg9[%c0_39, %c1_40, %c0_41] : memref<2x18x128xf32, #tpu.memory_space<vmem>>, vector<2x16x128xf32>
    tpu.vector_store %arg9[%c0_39, %c1_40, %c0_41], %49 {strides = array<i32>} : memref<2x18x128xf32, #tpu.memory_space<vmem>>, vector<2x16x128xf32>,
    %c0_42 = arith.constant 0 : index
    %c0_43 = arith.constant 0 : index
    %c0_44 = arith.constant 0 : index
    %51 = vector.load %arg9[%c0_42, %c0_43, %c0_44] : memref<2x18x128xf32, #tpu.memory_space<vmem>>, vector<2x16x128xf32>
    %52 = vector.shape_cast %51 : vector<2x16x128xf32> to vector<32x128xf32>
    %53 = arith.truncf %52 : vector<32x128xf32> to vector<32x128xbf16>
    %c0_45 = arith.constant 0 : index
    %c0_46 = arith.constant 0 : index
    %54 = vector.load %arg10[%c0_45, %c0_46] : memref<32x384xbf16, #tpu.memory_space<vmem>>, vector<32x128xbf16>
    tpu.vector_store %arg10[%c0_45, %c0_46], %53 {strides = array<i32>} : memref<32x384xbf16, #tpu.memory_space<vmem>>, vector<32x128xbf16>,
    %c0_47 = arith.constant 0 : index
    %c1_48 = arith.constant 1 : index
    %c0_49 = arith.constant 0 : index
    %55 = vector.load %arg9[%c0_47, %c1_48, %c0_49] : memref<2x18x128xf32, #tpu.memory_space<vmem>>, vector<2x16x128xf32>
    %56 = vector.shape_cast %55 : vector<2x16x128xf32> to vector<32x128xf32>
    %57 = arith.truncf %56 : vector<32x128xf32> to vector<32x128xbf16>
    %c0_50 = arith.constant 0 : index
    %c128_51 = arith.constant 128 : index
    %58 = vector.load %arg10[%c0_50, %c128_51] : memref<32x384xbf16, #tpu.memory_space<vmem>>, vector<32x128xbf16>
    tpu.vector_store %arg10[%c0_50, %c128_51], %57 {strides = array<i32>} : memref<32x384xbf16, #tpu.memory_space<vmem>>, vector<32x128xbf16>,
    %c0_52 = arith.constant 0 : index
    %c2_53 = arith.constant 2 : index
    %c0_54 = arith.constant 0 : index
    %59 = vector.load %arg9[%c0_52, %c2_53, %c0_54] : memref<2x18x128xf32, #tpu.memory_space<vmem>>, vector<2x16x128xf32>
    %60 = vector.shape_cast %59 : vector<2x16x128xf32> to vector<32x128xf32>
    %61 = arith.truncf %60 : vector<32x128xf32> to vector<32x128xbf16>
    %c0_55 = arith.constant 0 : index
    %c256_56 = arith.constant 256 : index
    %62 = vector.load %arg10[%c0_55, %c256_56] : memref<32x384xbf16, #tpu.memory_space<vmem>>, vector<32x128xbf16>
    tpu.vector_store %arg10[%c0_55, %c256_56], %61 {strides = array<i32>} : memref<32x384xbf16, #tpu.memory_space<vmem>>, vector<32x128xbf16>,
    %c0_57 = arith.constant 0 : index
    %c0_58 = arith.constant 0 : index
    %63 = vector.load %arg10[%c0_57, %c0_58] : memref<32x384xbf16, #tpu.memory_space<vmem>>, vector<32x384xbf16>
    %c0_59 = arith.constant 0 : index
    %c0_60 = arith.constant 0 : index
    %64 = vector.load %arg4[%c0_59, %c0_60] : memref<384x128xbf16, #tpu.memory_space<vmem>>, vector<384x128xbf16>
    %cst_61 = arith.constant dense<0.000000e+00> : vector<32x128xf32>
    %65 = tpu.matmul %63, %64, %cst_61 {dimension_numbers = #tpu.dot_dimension_numbers<[1], [0], [0], [1], [0, 0, 1, 1], [], []>} : vector<32x384xbf16>, vector<384x128xbf16>, vector<32x128xf32> -> vector<32x128xf32>
    %cst_62 = arith.constant dense<0.000000e+00> : vector<128xf32>
    %66 = vector.multi_reduction <add>, %65, %cst_62 [0] : vector<32x128xf32> to vector<128xf32>
    %67 = vector.shape_cast %66 : vector<128xf32> to vector<1x128xf32>
    %68 = arith.mulf %65, %65 : vector<32x128xf32>
    %cst_63 = arith.constant dense<0.000000e+00> : vector<128xf32>
    %69 = vector.multi_reduction <add>, %68, %cst_63 [0] : vector<32x128xf32> to vector<128xf32>
    %70 = vector.shape_cast %69 : vector<128xf32> to vector<1x128xf32>
    %71 = tpu.concatenate %67, %70 in 0 : vector<1x128xf32>, vector<1x128xf32> -> vector<2x128xf32>
    %c0_64 = arith.constant 0 : index
    %c0_65 = arith.constant 0 : index
    %72 = vector.load %arg7[%c0_64, %c0_65] : memref<128x128xf32, #tpu.memory_space<vmem>>, vector<128x128xf32>
    %cst_66 = arith.constant dense<0.000000e+00> : vector<2x128xf32>
    %73 = tpu.matmul %71, %72, %cst_66 {dimension_numbers = #tpu.dot_dimension_numbers<[1], [0], [0], [1], [0, 0, 1, 1], [], []>} : vector<2x128xf32>, vector<128x128xf32>, vector<2x128xf32> -> vector<2x128xf32>
    %cst_67 = arith.constant 0.001953125 : f32
    %74 = vector.broadcast %cst_67 : f32 to vector<2x128xf32>
    %75 = arith.mulf %73, %74 : vector<2x128xf32>
    %76 = vector.extract_strided_slice %75 {offsets = [0, 0], sizes = [1, 128], strides = [1, 1]} : vector<2x128xf32> to vector<1x128xf32>
    %77 = vector.extract_strided_slice %75 {offsets = [1, 0], sizes = [1, 128], strides = [1, 1]} : vector<2x128xf32> to vector<1x128xf32>
    %78 = arith.mulf %76, %76 : vector<1x128xf32>
    %79 = arith.subf %77, %78 : vector<1x128xf32>
    %c0_68 = arith.constant 0 : index
    %c0_69 = arith.constant 0 : index
    %80 = vector.load %arg5[%c0_68, %c0_69] : memref<1x128xf32, #tpu.memory_space<vmem>>, vector<1x128xf32>
    %cst_70 = arith.constant 9.99999974E-6 : f32
    %81 = vector.broadcast %cst_70 : f32 to vector<1x128xf32>
    %82 = arith.addf %79, %81 : vector<1x128xf32>
    %83 = math.rsqrt %82 : vector<1x128xf32>
    %84 = arith.mulf %80, %83 : vector<1x128xf32>
    %c0_71 = arith.constant 0 : index
    %c0_72 = arith.constant 0 : index
    %85 = vector.load %arg6[%c0_71, %c0_72] : memref<1x128xf32, #tpu.memory_space<vmem>>, vector<1x128xf32>
    %86 = arith.mulf %76, %84 : vector<1x128xf32>
    %87 = arith.subf %85, %86 : vector<1x128xf32>
    %88 = vector.broadcast %84 : vector<1x128xf32> to vector<32x128xf32>
    %89 = arith.mulf %65, %88 : vector<32x128xf32>
    %90 = vector.broadcast %87 : vector<1x128xf32> to vector<32x128xf32>
    %91 = arith.addf %89, %90 : vector<32x128xf32>
    %c0_73 = arith.constant 0 : index
    %c0_74 = arith.constant 0 : index
    %c0_75 = arith.constant 0 : index
    %92 = vector.load %arg0[%c0_73, %c0_74, %c0_75] : memref<2x16x128xf32, #tpu.memory_space<vmem>>, vector<2x16x128xf32>
    %93 = vector.shape_cast %92 : vector<2x16x128xf32> to vector<32x128xf32>
    %94 = arith.addf %91, %93 : vector<32x128xf32>
    %cst_76 = arith.constant 0.000000e+00 : f32
    %95 = vector.broadcast %cst_76 : f32 to vector<32x128xf32>
    %96 = arith.maximumf %94, %95 : vector<32x128xf32>
    %97 = vector.shape_cast %96 : vector<32x128xf32> to vector<2x16x128xf32>
    %c0_77 = arith.constant 0 : index
    %c0_78 = arith.constant 0 : index
    %c0_79 = arith.constant 0 : index
    %98 = vector.load %arg8[%c0_77, %c0_78, %c0_79] : memref<2x16x128xf32, #tpu.memory_space<vmem>>, vector<2x16x128xf32>
    tpu.vector_store %arg8[%c0_77, %c0_78, %c0_79], %97 {strides = array<i32>} : memref<2x16x128xf32, #tpu.memory_space<vmem>>, vector<2x16x128xf32>,
    return
  }
}

</mosaic_0001>

<llo_original>
// kernel: tpu_custom_call.1
$region0: #{tpu_custom_call.1}
  #allocation0 [shape = 'u32[]', space=smem, size = 0x4, offset = 0x4, fixed_abs, tag = 'smem constant byte address 0x4 - core index']
  #allocation1 [shape = 'u32[144,128]{1,0:T(1,128)}', space=vmem, size = 0x12000, scoped, tag = 'internal scratch']
  #allocation2 [shape = 'f32[2,18,128]{2,1,0:T(8,128)}', space=vmem, size = 0x6000, scoped, tag = 'scratch operand']
  #allocation3 [shape = 'bf16[32,384]{1,0:T(16,128)(2,1)}', space=vmem, size = 0x6000, scoped, tag = 'scratch operand']
  %s0 = inlined_call_operand.hbm [shape: f32[2,16,128], index: 0, kind: input, shape index: {}]
  %s1 = inlined_call_operand.hbm [shape: bf16[384,128], index: 1, kind: input, shape index: {}]
  %s2 = inlined_call_operand.vmem [shape: f32[1,128], index: 2, kind: input, shape index: {}]
  %s3 = inlined_call_operand.vmem [shape: f32[1,128], index: 3, kind: input, shape index: {}]
  %s4 = inlined_call_operand.hbm [shape: bf16[384,128], index: 4, kind: input, shape index: {}]
  %s5 = inlined_call_operand.vmem [shape: f32[1,128], index: 5, kind: input, shape index: {}]
  %s6 = inlined_call_operand.vmem [shape: f32[1,128], index: 6, kind: input, shape index: {}]
  %s7 = inlined_call_operand.hbm [shape: f32[128,128], index: 7, kind: input, shape index: {}]
  %s8 = inlined_call_operand.hbm [shape: f32[2,16,128], index: 8, kind: output, shape index: {}]
  %s9 = sld [smem:[#allocation0]]
  $region58: #{tpu_custom_call.1} parent=0
    _
  %s11 = ssub.s32 1, %s9
  %s12 = scalar_select 0, %s11, %s9
  $region1: #{tpu_custom_call.1} parent=0
    #allocation4 [shape = 'u8[16384]{0}', space=vmem, size = 0x4000, scoped, tag = 'input window, operand 0, single buffered']
    #allocation5 [shape = 's32[1]{0}', space=sflag, size = 0x4, scoped, tag = 'scoped memory for tpu_custom_call.1']
    #allocation6 [shape = 's32[1]{0}', space=sflag, size = 0x4, scoped, tag = 'scoped memory for tpu_custom_call.1']
    #allocation7 [shape = 'u8[98304]{0}', space=vmem, size = 0x18000, scoped, tag = 'input window, operand 1, single buffered']
    #allocation8 [shape = 's32[1]{0}', space=sflag, size = 0x4, scoped, tag = 'scoped memory for tpu_custom_call.1']
    #allocation9 [shape = 'u8[98304]{0}', space=vmem, size = 0x18000, scoped, tag = 'input window, operand 4, single buffered']
    #allocation10 [shape = 'u8[65536]{0}', space=vmem, size = 0x10000, scoped, tag = 'input window, operand 7, single buffered']
    #allocation11 [shape = 's32[1]{0}', space=sflag, size = 0x4, scoped, tag = 'scoped memory for tpu_custom_call.1']
    #allocation12 [shape = 'u8[16384]{0}', space=vmem, size = 0x4000, scoped, tag = 'output window, operand 0, single buffered']
    %13 = vsyncpa [#allocation5], 0
    %14 = vsyncpa [#allocation8], 0
    %15 = vsyncpa [#allocation11], 0
    %16 = vsyncpa [#allocation6], 0
    // Predicated region
    $region2: #{tpu_custom_call.1} parent=1 // pred_check
      _
    $region3: #{tpu_custom_call.1} parent=1 // pred_check_branch
      %18 = sbr.rel (0) target = $region5
    $region4: #{tpu_custom_call.1} parent=1 // pred_region
      %s20 = ssub.s32 512, 512
      %21 = vsyncadd [#allocation5], %s20
      %s22 = sshll.u32 [#allocation4], 4
      %s23 = int_to_ptr.vmem [resolvable:$true] %s22
      %28 = dma.hbm_to_vmem [thread:$0]  %s0, 512, %s23, [#allocation5], 128, 128, 8
    $region5: #{tpu_custom_call.1} parent=1 // pred_fallthru
      _
    // Predicated region
    $region6: #{tpu_custom_call.1} parent=1 // pred_check
      _
    $region7: #{tpu_custom_call.1} parent=1 // pred_check_branch
      %30 = sbr.rel (0) target = $region9
    $region8: #{tpu_custom_call.1} parent=1 // pred_region
      %s32 = ssub.s32 3072, 3072
      %33 = vsyncadd [#allocation8], %s32
      %s34 = sshll.u32 [#allocation7], 4
      %s35 = int_to_ptr.vmem [resolvable:$true] %s34
      %40 = dma.hbm_to_vmem [thread:$0]  %s1, 3072, %s35, [#allocation8], 64, 64, 4
    $region9: #{tpu_custom_call.1} parent=1 // pred_fallthru
      _
    // Predicated region
    $region10: #{tpu_custom_call.1} parent=1 // pred_check
      _
    $region11: #{tpu_custom_call.1} parent=1 // pred_check_branch
      %42 = sbr.rel (0) target = $region13
    $region12: #{tpu_custom_call.1} parent=1 // pred_region
      _
    $region13: #{tpu_custom_call.1} parent=1 // pred_fallthru
      _
    // Predicated region
    $region14: #{tpu_custom_call.1} parent=1 // pred_check
      _
    $region15: #{tpu_custom_call.1} parent=1 // pred_check_branch
      %44 = sbr.rel (0) target = $region17
    $region16: #{tpu_custom_call.1} parent=1 // pred_region
      _
    $region17: #{tpu_custom_call.1} parent=1 // pred_fallthru
      _
    // Predicated region
    $region18: #{tpu_custom_call.1} parent=1 // pred_check
      _
    $region19: #{tpu_custom_call.1} parent=1 // pred_check_branch
      %46 = sbr.rel (0) target = $region21
    $region20: #{tpu_custom_call.1} parent=1 // pred_region
      %s48 = ssub.s32 3072, 3072
      %49 = vsyncadd [#allocation8], %s48
      %s50 = sshll.u32 [#allocation9], 4
      %s51 = int_to_ptr.vmem [resolvable:$true] %s50
      %56 = dma.hbm_to_vmem [thread:$0]  %s4, 3072, %s51, [#allocation8], 64, 64, 4
    $region21: #{tpu_custom_call.1} parent=1 // pred_fallthru
      _
    // Predicated region
    $region22: #{tpu_custom_call.1} parent=1 // pred_check
      _
    $region23: #{tpu_custom_call.1} parent=1 // pred_check_branch
      %58 = sbr.rel (0) target = $region25
    $region24: #{tpu_custom_call.1} parent=1 // pred_region
      _
    $region25: #{tpu_custom_call.1} parent=1 // pred_fallthru
      _
    // Predicated region
    $region26: #{tpu_custom_call.1} parent=1 // pred_check
      _
    $region27: #{tpu_custom_call.1} parent=1 // pred_check_branch
      %60 = sbr.rel (0) target = $region29
    $region28: #{tpu_custom_call.1} parent=1 // pred_region
      _
    $region29: #{tpu_custom_call.1} parent=1 // pred_fallthru
      _
    // Predicated region
    $region30: #{tpu_custom_call.1} parent=1 // pred_check
      _
    $region31: #{tpu_custom_call.1} parent=1 // pred_check_branch
      %62 = sbr.rel (0) target = $region33
    $region32: #{tpu_custom_call.1} parent=1 // pred_region
      %s64 = ssub.s32 2048, 2048
      %65 = vsyncadd [#allocation11], %s64
      %s66 = sshll.u32 [#allocation10], 4
      %s67 = int_to_ptr.vmem [resolvable:$true] %s66
      %72 = dma.hbm_to_vmem [thread:$0]  %s7, 2048, %s67, [#allocation11], 128, 128, 8
    $region33: #{tpu_custom_call.1} parent=1 // pred_fallthru
      _
    // Predicated region
    $region34: #{tpu_custom_call.1} parent=1 // pred_check
      _
    $region35: #{tpu_custom_call.1} parent=1 // pred_check_branch
      %74 = sbr.rel (0) target = $region37
    $region36: #{tpu_custom_call.1} parent=1 // pred_region
      %75 = dma.done [#allocation5], 512
    $region37: #{tpu_custom_call.1} parent=1 // pred_fallthru
      _
    // Predicated region
    $region38: #{tpu_custom_call.1} parent=1 // pred_check
      _
    $region39: #{tpu_custom_call.1} parent=1 // pred_check_branch
      %77 = sbr.rel (0) target = $region41
    $region40: #{tpu_custom_call.1} parent=1 // pred_region
      %78 = dma.done [#allocation8], 3072
    $region41: #{tpu_custom_call.1} parent=1 // pred_fallthru
      _
    // Predicated region
    $region42: #{tpu_custom_call.1} parent=1 // pred_check
      _
    $region43: #{tpu_custom_call.1} parent=1 // pred_check_branch
      %80 = sbr.rel (0) target = $region45
    $region44: #{tpu_custom_call.1} parent=1 // pred_region
      %81 = dma.done [#allocation8], 3072
    $region45: #{tpu_custom_call.1} parent=1 // pred_fallthru
      _
    // Predicated region
    $region46: #{tpu_custom_call.1} parent=1 // pred_check
      _
    $region47: #{tpu_custom_call.1} parent=1 // pred_check_branch
      %83 = sbr.rel (0) target = $region49
    $region48: #{tpu_custom_call.1} parent=1 // pred_region
      %84 = dma.done [#allocation11], 2048
    $region49: #{tpu_custom_call.1} parent=1 // pred_fallthru
      _
    %86 = vst [vmem:[#allocation2] sm:$0x1] 0.0
    %87 = vst [vmem:[#allocation2 + $0x18] sm:$0x1] 0.0
    %88 = vst [vmem:[#allocation2 + $0x11] sm:$0x1] 0.0
    %89 = vst [vmem:[#allocation2 + $0x29] sm:$0x1] 0.0
    %v90 = vld [vmem:[#allocation4] sm:$0xff]
    %v91 = vld [vmem:[#allocation4 + $0x8] sm:$0xff]
    %v92 = vld [vmem:[#allocation4 + $0x10] sm:$0xff]
    %v93 = vld [vmem:[#allocation4 + $0x18] sm:$0xff]
    %94 = vst [vmem:[#allocation2 + $0x1] sm:$0xff] %v90
    %95 = vst [vmem:[#allocation2 + $0x9] sm:$0xff] %v91
    %96 = vst [vmem:[#allocation2 + $0x19] sm:$0xff] %v92
    %97 = vst [vmem:[#allocation2 + $0x21] sm:$0xff] %v93
    %v98 = vld [vmem:[#allocation2] sm:$0xff]
    %v99 = vld [vmem:[#allocation2 + $0x8] sm:$0xff]
    %v100 = vld [vmem:[#allocation2 + $0x18] sm:$0xff]
    %v101 = vld [vmem:[#allocation2 + $0x20] sm:$0xff]
    %v102 = vpack.c.bf16 %v99, %v98
    %v103 = vpack.c.bf16 %v101, %v100
    %104 = vst [vmem:[#allocation3] sm:$0xff] %v102
    %105 = vst [vmem:[#allocation3 + $0x18] sm:$0xff] %v103
    %v106 = vld [vmem:[#allocation2 + $0x1] sm:$0xff]
    %v107 = vld [vmem:[#allocation2 + $0x9] sm:$0xff]
    %v108 = vld [vmem:[#allocation2 + $0x19] sm:$0xff]
    %v109 = vld [vmem:[#allocation2 + $0x21] sm:$0xff]
    %v110 = vpack.c.bf16 %v107, %v106
    %v111 = vpack.c.bf16 %v109, %v108
    %112 = vst [vmem:[#allocation3 + $0x8] sm:$0xff] %v110
    %113 = vst [vmem:[#allocation3 + $0x20] sm:$0xff] %v111
    %v114 = vld [vmem:[#allocation2 + $0x2] sm:$0xff]
    %v115 = vld [vmem:[#allocation2 + $0xa] sm:$0xff]
    %v116 = vld [vmem:[#allocation2 + $0x1a] sm:$0xff]
    %v117 = vld [vmem:[#allocation2 + $0x22] sm:$0xff]
    %v118 = vpack.c.bf16 %v115, %v114
    %v119 = vpack.c.bf16 %v117, %v116
    %120 = vst [vmem:[#allocation3 + $0x10] sm:$0xff] %v118
    %121 = vst [vmem:[#allocation3 + $0x28] sm:$0xff] %v119
    %v122 = vld [vmem:[#allocation3] sm:$0xff]
    %v123 = vld [vmem:[#allocation3 + $0x8] sm:$0xff]
    %v124 = vld [vmem:[#allocation3 + $0x10] sm:$0xff]
    %v125 = vld [vmem:[#allocation3 + $0x18] sm:$0xff]
    %v126 = vld [vmem:[#allocation3 + $0x20] sm:$0xff]
    %v127 = vld [vmem:[#allocation3 + $0x28] sm:$0xff]
    %v128 = vld [vmem:[#allocation7] sm:$0xf]
    %v129 = vld [vmem:[#allocation7 + $0x4] sm:$0xf]
    %v130 = vld [vmem:[#allocation7 + $0x8] sm:$0xf]
    %v131 = vld [vmem:[#allocation7 + $0xc] sm:$0xf]
    %v132 = vld [vmem:[#allocation7 + $0x10] sm:$0xf]
    %v133 = vld [vmem:[#allocation7 + $0x14] sm:$0xf]
    %v134 = vld [vmem:[#allocation7 + $0x18] sm:$0xf]
    %v135 = vld [vmem:[#allocation7 + $0x1c] sm:$0xf]
    %v136 = vld [vmem:[#allocation7 + $0x20] sm:$0xf]
    %v137 = vld [vmem:[#allocation7 + $0x24] sm:$0xf]
    %v138 = vld [vmem:[#allocation7 + $0x28] sm:$0xf]
    %v139 = vld [vmem:[#allocation7 + $0x2c] sm:$0xf]
    %v140 = vld [vmem:[#allocation7 + $0x30] sm:$0xf]
    %v141 = vld [vmem:[#allocation7 + $0x34] sm:$0xf]
    %v142 = vld [vmem:[#allocation7 + $0x38] sm:$0xf]
    %v143 = vld [vmem:[#allocation7 + $0x3c] sm:$0xf]
    %v144 = vld [vmem:[#allocation7 + $0x40] sm:$0xf]
    %v145 = vld [vmem:[#allocation7 + $0x44] sm:$0xf]
    %v146 = vld [vmem:[#allocation7 + $0x48] sm:$0xf]
    %v147 = vld [vmem:[#allocation7 + $0x4c] sm:$0xf]
    %v148 = vld [vmem:[#allocation7 + $0x50] sm:$0xf]
    %v149 = vld [vmem:[#allocation7 + $0x54] sm:$0xf]
    %v150 = vld [vmem:[#allocation7 + $0x58] sm:$0xf]
    %v151 = vld [vmem:[#allocation7 + $0x5c] sm:$0xf]
    %v152 = vld [vmem:[#allocation7 + $0x60] sm:$0xf]
    %v153 = vld [vmem:[#allocation7 + $0x64] sm:$0xf]
    %v154 = vld [vmem:[#allocation7 + $0x68] sm:$0xf]
    %v155 = vld [vmem:[#allocation7 + $0x6c] sm:$0xf]
    %v156 = vld [vmem:[#allocation7 + $0x70] sm:$0xf]
    %v157 = vld [vmem:[#allocation7 + $0x74] sm:$0xf]
    %v158 = vld [vmem:[#allocation7 + $0x78] sm:$0xf]
    %v159 = vld [vmem:[#allocation7 + $0x7c] sm:$0xf]
    %v160 = vld [vmem:[#allocation7 + $0x80] sm:$0xf]
    %v161 = vld [vmem:[#allocation7 + $0x84] sm:$0xf]
    %v162 = vld [vmem:[#allocation7 + $0x88] sm:$0xf]
    %v163 = vld [vmem:[#allocation7 + $0x8c] sm:$0xf]
    %v164 = vld [vmem:[#allocation7 + $0x90] sm:$0xf]
    %v165 = vld [vmem:[#allocation7 + $0x94] sm:$0xf]
    %v166 = vld [vmem:[#allocation7 + $0x98] sm:$0xf]
    %v167 = vld [vmem:[#allocation7 + $0x9c] sm:$0xf]
    %v168 = vld [vmem:[#allocation7 + $0xa0] sm:$0xf]
    %v169 = vld [vmem:[#allocation7 + $0xa4] sm:$0xf]
    %v170 = vld [vmem:[#allocation7 + $0xa8] sm:$0xf]
    %v171 = vld [vmem:[#allocation7 + $0xac] sm:$0xf]
    %v172 = vld [vmem:[#allocation7 + $0xb0] sm:$0xf]
    %v173 = vld [vmem:[#allocation7 + $0xb4] sm:$0xf]
    %v174 = vld [vmem:[#allocation7 + $0xb8] sm:$0xf]
    %v175 = vld [vmem:[#allocation7 + $0xbc] sm:$0xf]
    %v224 = vunpack.c.l.b16 %v128
    %v225 = vunpack.c.l.b16 %v129
    %v226 = vunpack.c.l.b16 %v130
    %v227 = vunpack.c.l.b16 %v131
    %v228 = vunpack.c.l.b16 %v132
    %v229 = vunpack.c.l.b16 %v133
    %v230 = vunpack.c.l.b16 %v134
    %v231 = vunpack.c.l.b16 %v135
    %v232 = vunpack.c.l.b16 %v136
    %v233 = vunpack.c.l.b16 %v137
    %v234 = vunpack.c.l.b16 %v138
    %v235 = vunpack.c.l.b16 %v139
    %v236 = vunpack.c.l.b16 %v140
    %v237 = vunpack.c.l.b16 %v141
    %v238 = vunpack.c.l.b16 %v142
    %v239 = vunpack.c.l.b16 %v143
    %v240 = vunpack.c.l.b16 %v144
    %v241 = vunpack.c.l.b16 %v145
    %v242 = vunpack.c.l.b16 %v146
    %v243 = vunpack.c.l.b16 %v147
    %v244 = vunpack.c.l.b16 %v148
    %v245 = vunpack.c.l.b16 %v149
    %v246 = vunpack.c.l.b16 %v150
    %v247 = vunpack.c.l.b16 %v151
    %v248 = vunpack.c.l.b16 %v152
    %v249 = vunpack.c.l.b16 %v153
    %v250 = vunpack.c.l.b16 %v154
    %v251 = vunpack.c.l.b16 %v155
    %v252 = vunpack.c.l.b16 %v156
    %v253 = vunpack.c.l.b16 %v157
    %v254 = vunpack.c.l.b16 %v158
    %v255 = vunpack.c.l.b16 %v159
    %v256 = vunpack.c.l.b16 %v160
    %v257 = vunpack.c.l.b16 %v161
    %v258 = vunpack.c.l.b16 %v162
    %v259 = vunpack.c.l.b16 %v163
    %v260 = vunpack.c.l.b16 %v164
    %v261 = vunpack.c.l.b16 %v165
    %v262 = vunpack.c.l.b16 %v166
    %v263 = vunpack.c.l.b16 %v167
    %v264 = vunpack.c.l.b16 %v168
    %v265 = vunpack.c.l.b16 %v169
    %v266 = vunpack.c.l.b16 %v170
    %v267 = vunpack.c.l.b16 %v171
    %v268 = vunpack.c.l.b16 %v172
    %v269 = vunpack.c.l.b16 %v173
    %v270 = vunpack.c.l.b16 %v174
    %v271 = vunpack.c.l.b16 %v175
    %v272 = vpack.c.b16 %v225, %v224
    %v273 = vpack.c.b16 %v227, %v226
    %v274 = vpack.c.b16 %v229, %v228
    %v275 = vpack.c.b16 %v231, %v230
    %v276 = vpack.c.b16 %v233, %v232
    %v277 = vpack.c.b16 %v235, %v234
    %v278 = vpack.c.b16 %v237, %v236
    %v279 = vpack.c.b16 %v239, %v238
    %v280 = vpack.c.b16 %v241, %v240
    %v281 = vpack.c.b16 %v243, %v242
    %v282 = vpack.c.b16 %v245, %v244
    %v283 = vpack.c.b16 %v247, %v246
    %v284 = vpack.c.b16 %v249, %v248
    %v285 = vpack.c.b16 %v251, %v250
    %v286 = vpack.c.b16 %v253, %v252
    %v287 = vpack.c.b16 %v255, %v254
    %v288 = vpack.c.b16 %v257, %v256
    %v289 = vpack.c.b16 %v259, %v258
    %v290 = vpack.c.b16 %v261, %v260
    %v291 = vpack.c.b16 %v263, %v262
    %v292 = vpack.c.b16 %v265, %v264
    %v293 = vpack.c.b16 %v267, %v266
    %v294 = vpack.c.b16 %v269, %v268
    %v295 = vpack.c.b16 %v271, %v270
    %320 = vmatprep.subr.bf16.mxu0 0
    %321 = vmatpush1.bf16.msra.mxu0 %v272
    %322 = vmatprep.subr.bf16.mxu0 0
    %323 = vmatpush1.bf16.msra.mxu0 %v273
    %324 = vmatprep.subr.bf16.mxu0 0
    %325 = vmatpush1.bf16.msra.mxu0 %v274
    %326 = vmatprep.subr.bf16.mxu0 0
    %327 = vmatpush1.bf16.msra.mxu0 %v275
    %328 = vmatprep.subr.bf16.mxu0 0
    %329 = vmatpush1.bf16.msra.mxu0 %v276
    %330 = vmatprep.subr.bf16.mxu0 0
    %331 = vmatpush1.bf16.msra.mxu0 %v277
    %332 = vmatprep.subr.bf16.mxu0 0
    %333 = vmatpush1.bf16.msra.mxu0 %v278
    %334 = vmatprep.subr.bf16.mxu0 0
    %335 = vmatpush1.bf16.msra.mxu0 %v279
    %336 = vmatprep.subr.bf16.mxu0 0
    %337 = vmatpush1.bf16.msra.mxu0 %v280
    %338 = vmatprep.subr.bf16.mxu0 0
    %339 = vmatpush1.bf16.msra.mxu0 %v281
    %340 = vmatprep.subr.bf16.mxu0 0
    %341 = vmatpush1.bf16.msra.mxu0 %v282
    %342 = vmatprep.subr.bf16.mxu0 0
    %343 = vmatpush1.bf16.msra.mxu0 %v283
    %344 = vmatprep.subr.bf16.mxu0 0
    %345 = vmatpush1.bf16.msra.mxu0 %v284
    %346 = vmatprep.subr.bf16.mxu0 0
    %347 = vmatpush1.bf16.msra.mxu0 %v285
    %348 = vmatprep.subr.bf16.mxu0 0
    %349 = vmatpush1.bf16.msra.mxu0 %v286
    %350 = vmatprep.subr.bf16.mxu0 0
    %351 = vmatpush1.bf16.msra.mxu0 %v287
    %352 = vmatprep.mubr.bf16.mxu0 %v123
    %353 = vmatmul.mubr.bf16.gmra.mrb[0].mxu0 %v122
    %v354 = vpop.f32.mrb[0].mxu0
    %v355 = vadd.f32 0.0, %v354
    %v356 = vpop.f32.mrb[0].mxu0
    %v357 = vpop.f32.mrb[0].mxu0
    %v358 = vadd.f32 0.0, %v357
    %v359 = vpop.f32.mrb[0].mxu0
    %360 = vmatprep.mubr.bf16.mxu0 %v126
    %361 = vmatmul.mubr.bf16.gmra.mrb[0].mxu0 %v125
    %v362 = vpop.f32.mrb[0].mxu0
    %v363 = vadd.f32 0.0, %v362
    %v364 = vpop.f32.mrb[0].mxu0
    %v365 = vpop.f32.mrb[0].mxu0
    %v366 = vadd.f32 0.0, %v365
    %v367 = vpop.f32.mrb[0].mxu0
    %368 = vdwg.mxu0
    %369 = vmatprep.subr.bf16.mxu0 0
    %370 = vmatpush1.bf16.msra.mxu0 %v288
    %371 = vmatprep.subr.bf16.mxu0 0
    %372 = vmatpush1.bf16.msra.mxu0 %v289
    %373 = vmatprep.subr.bf16.mxu0 0
    %374 = vmatpush1.bf16.msra.mxu0 %v290
    %375 = vmatprep.subr.bf16.mxu0 0
    %376 = vmatpush1.bf16.msra.mxu0 %v291
    %377 = vmatprep.subr.bf16.mxu0 0
    %378 = vmatpush1.bf16.msra.mxu0 %v292
    %379 = vmatprep.subr.bf16.mxu0 0
    %380 = vmatpush1.bf16.msra.mxu0 %v293
    %381 = vmatprep.subr.bf16.mxu0 0
    %382 = vmatpush1.bf16.msra.mxu0 %v294
    %383 = vmatprep.subr.bf16.mxu0 0
    %384 = vmatpush1.bf16.msra.mxu0 %v295
    %385 = vmatprep.subr.bf16.mxu0 0
    %386 = vmatpush1.bf16.msra.mxu0 0
    %387 = vmatprep.subr.bf16.mxu0 0
    %388 = vmatpush1.bf16.msra.mxu0 0
    %389 = vmatprep.subr.bf16.mxu0 0
    %390 = vmatpush1.bf16.msra.mxu0 0
    %391 = vmatprep.subr.bf16.mxu0 0
    %392 = vmatpush1.bf16.msra.mxu0 0
    %393 = vmatprep.subr.bf16.mxu0 0
    %394 = vmatpush1.bf16.msra.mxu0 0
    %395 = vmatprep.subr.bf16.mxu0 0
    %396 = vmatpush1.bf16.msra.mxu0 0
    %397 = vmatprep.subr.bf16.mxu0 0
    %398 = vmatpush1.bf16.msra.mxu0 0
    %399 = vmatprep.subr.bf16.mxu0 0
    %400 = vmatpush1.bf16.msra.mxu0 0
    %401 = vmatprep.mubr.bf16.mxu0 0
    %402 = vmatmul.mubr.bf16.gmra.mrb[0].mxu0 %v124
    %v403 = vpop.f32.mrb[0].mxu0
    %v404 = vadd.f32 %v355, %v403
    %v405 = vpop.f32.mrb[0].mxu0
    %v406 = vpop.f32.mrb[0].mxu0
    %v407 = vadd.f32 %v358, %v406
    %v408 = vpop.f32.mrb[0].mxu0
    %409 = vmatprep.mubr.bf16.mxu0 0
    %410 = vmatmul.mubr.bf16.gmra.mrb[0].mxu0 %v127
    %v411 = vpop.f32.mrb[0].mxu0
    %v412 = vadd.f32 %v363, %v411
    %v413 = vpop.f32.mrb[0].mxu0
    %v414 = vpop.f32.mrb[0].mxu0
    %v415 = vadd.f32 %v366, %v414
    %v416 = vpop.f32.mrb[0].mxu0
    %417 = vdwg.mxu0
    %v418 = vadd.f32 %v404, %v407
    %v419 = vadd.f32 %v418, %v412
    %v420 = vadd.f32 %v419, %v415
    %v421 = vrot.slane %v420, 4
    %v422 = vadd.f32 %v420, %v421
    %v423 = vrot.slane %v422, 2
    %v424 = vadd.f32 %v422, %v423
    %v425 = vrot.slane %v424, 1
    %v426 = vadd.f32 %v424, %v425
    %v427 = vmul.f32 %v404, %v404
    %v428 = vmul.f32 %v407, %v407
    %v429 = vmul.f32 %v412, %v412
    %v430 = vmul.f32 %v415, %v415
    %v431 = vadd.f32 %v427, %v428
    %v432 = vadd.f32 %v431, %v429
    %v433 = vadd.f32 %v432, %v430
    %v434 = vrot.slane %v433, 4
    %v435 = vadd.f32 %v433, %v434
    %v436 = vrot.slane %v435, 2
    %v437 = vadd.f32 %v435, %v436
    %v438 = vrot.slane %v437, 1
    %v439 = vadd.f32 %v437, %v438
    %vm440 = vcmask 1040384
    %v441 = vsel %vm440, %v426, %v439
    %v442 = vld [vmem:[#allocation10] sm:$0xff]
    %v443 = vld [vmem:[#allocation10 + $0x8] sm:$0xff]
    %v444 = vld [vmem:[#allocation10 + $0x10] sm:$0xff]
    %v445 = vld [vmem:[#allocation10 + $0x18] sm:$0xff]
    %v446 = vld [vmem:[#allocation10 + $0x20] sm:$0xff]
    %v447 = vld [vmem:[#allocation10 + $0x28] sm:$0xff]
    %v448 = vld [vmem:[#allocation10 + $0x30] sm:$0xff]
    %v449 = vld [vmem:[#allocation10 + $0x38] sm:$0xff]
    %v450 = vld [vmem:[#allocation10 + $0x40] sm:$0xff]
    %v451 = vld [vmem:[#allocation10 + $0x48] sm:$0xff]
    %v452 = vld [vmem:[#allocation10 + $0x50] sm:$0xff]
    %v453 = vld [vmem:[#allocation10 + $0x58] sm:$0xff]
    %v454 = vld [vmem:[#allocation10 + $0x60] sm:$0xff]
    %v455 = vld [vmem:[#allocation10 + $0x68] sm:$0xff]
    %v456 = vld [vmem:[#allocation10 + $0x70] sm:$0xff]
    %v457 = vld [vmem:[#allocation10 + $0x78] sm:$0xff]
    %458 = vmatprep.subr.mxu0 0.0
    %459 = vmatpush1.msra.mxu0 %v442
    %460 = vmatprep.subr.mxu0 0.0
    %461 = vmatpush1.msra.mxu0 %v443
    %462 = vmatprep.subr.mxu0 0.0
    %463 = vmatpush1.msra.mxu0 %v444
    %464 = vmatprep.subr.mxu0 0.0
    %465 = vmatpush1.msra.mxu0 %v445
    %466 = vmatprep.subr.mxu0 0.0
    %467 = vmatpush1.msra.mxu0 %v446
    %468 = vmatprep.subr.mxu0 0.0
    %469 = vmatpush1.msra.mxu0 %v447
    %470 = vmatprep.subr.mxu0 0.0
    %471 = vmatpush1.msra.mxu0 %v448
    %472 = vmatprep.subr.mxu0 0.0
    %473 = vmatpush1.msra.mxu0 %v449
    %474 = vmatprep.subr.mxu0 0.0
    %475 = vmatpush1.msra.mxu0 %v450
    %476 = vmatprep.subr.mxu0 0.0
    %477 = vmatpush1.msra.mxu0 %v451
    %478 = vmatprep.subr.mxu0 0.0
    %479 = vmatpush1.msra.mxu0 %v452
    %480 = vmatprep.subr.mxu0 0.0
    %481 = vmatpush1.msra.mxu0 %v453
    %482 = vmatprep.subr.mxu0 0.0
    %483 = vmatpush1.msra.mxu0 %v454
    %484 = vmatprep.subr.mxu0 0.0
    %485 = vmatpush1.msra.mxu0 %v455
    %486 = vmatprep.subr.mxu0 0.0
    %487 = vmatpush1.msra.mxu0 %v456
    %488 = vmatprep.subr.mxu0 0.0
    %489 = vmatpush1.msra.mxu0 %v457
    %490 = vmatprep.subr.mxu0 0.0
    %491 = vmatpush1.msra.mxu0 0.0
    %492 = vmatprep.subr.mxu0 0.0
    %493 = vmatpush1.msra.mxu0 0.0
    %494 = vmatprep.subr.mxu0 0.0
    %495 = vmatpush1.msra.mxu0 0.0
    %496 = vmatprep.subr.mxu0 0.0
    %497 = vmatpush1.msra.mxu0 0.0
    %498 = vmatprep.subr.mxu0 0.0
    %499 = vmatpush1.msra.mxu0 0.0
    %500 = vmatprep.subr.mxu0 0.0
    %501 = vmatpush1.msra.mxu0 0.0
    %502 = vmatprep.subr.mxu0 0.0
    %503 = vmatpush1.msra.mxu0 0.0
    %504 = vmatprep.subr.mxu0 0.0
    %505 = vmatpush1.msra.mxu0 0.0
    %506 = vmatprep.subr.mxu0 0.0
    %507 = vmatpush1.msra.mxu0 0.0
    %508 = vmatprep.subr.mxu0 0.0
    %509 = vmatpush1.msra.mxu0 0.0
    %510 = vmatprep.subr.mxu0 0.0
    %511 = vmatpush1.msra.mxu0 0.0
    %512 = vmatprep.subr.mxu0 0.0
    %513 = vmatpush1.msra.mxu0 0.0
    %514 = vmatprep.subr.mxu0 0.0
    %515 = vmatpush1.msra.mxu0 0.0
    %516 = vmatprep.subr.mxu0 0.0
    %517 = vmatpush1.msra.mxu0 0.0
    %518 = vmatprep.subr.mxu0 0.0
    %519 = vmatpush1.msra.mxu0 0.0
    %520 = vmatprep.subr.mxu0 0.0
    %521 = vmatpush1.msra.mxu0 0.0
    %522 = vmatprep.mubr.f32.mxu0 0.0
    %523 = vmatmul.mubr.f32.gmra.mrb[0].mxu0 %v441
    %v524 = vpop.f32.mrb[0].mxu0
    %v525 = vadd.f32 0.0, %v524
    %v526 = vpop.f32.mrb[0].mxu0
    %527 = vdwg.mxu0
    %v528 = vmul.f32 %v525, 0.001953125
    %v529 = vmul.f32 %v528, %v528
    %v531 = vrot.slane %v529, 7
    %v533 = vsub.f32 %v528, %v531
    %v534 = vld [vmem:[%s2] sm:$0x1]
    %v535 = vadd.f32 %v533, 1e-05
    %v536 = vrsqrt.pop %v535
    %v539 = vunpack.c.l.s4 1966171168
    %v540 = vunpack.c.0.s8 %v539
    %v541 = vlaneseq
    %v542 = vshrl.u32 %v541, 7
    %v543 = vsub.s32 %v540, %v542
    %v544 = vrot.slane %v536, %v543
    %v545 = vcombine.high %v544, %v544
    %v547 = vunpack.c.l.s4 1966171168
    %v548 = vunpack.c.0.s8 %v547
    %v549 = vlaneseq
    %v550 = vshrl.u32 %v549, 7
    %v551 = vsub.s32 %v548, %v550
    %v552 = vrot.slane %v545, %v551
    %v554 = vmul.f32 %v534, %v552
    %v555 = vld [vmem:[%s3] sm:$0x1]
    %v556 = vmul.f32 %v528, %v554
    %v557 = vsub.f32 %v555, %v556
    %v559 = vlaneseq
    %v560 = vshrl.u32 %v559, 7
    %v561 = vsub.s32 0, %v560
    %v562 = vrot.slane %v554, %v561
    %v564 = vmul.f32 %v404, %v562
    %v565 = vmul.f32 %v407, %v562
    %v566 = vmul.f32 %v412, %v562
    %v567 = vmul.f32 %v415, %v562
    %v569 = vlaneseq
    %v570 = vshrl.u32 %v569, 7
    %v571 = vsub.s32 0, %v570
    %v572 = vrot.slane %v557, %v571
    %v574 = vadd.f32 %v564, %v572
    %v575 = vadd.f32 %v565, %v572
    %v576 = vadd.f32 %v566, %v572
    %v577 = vadd.f32 %v567, %v572
    %v578 = vmax.f32 %v574, 0.0
    %v579 = vmax.f32 %v575, 0.0
    %v580 = vmax.f32 %v576, 0.0
    %v581 = vmax.f32 %v577, 0.0
    %582 = vst [vmem:[#allocation2 + $0x1] sm:$0xff] %v578
    %583 = vst [vmem:[#allocation2 + $0x9] sm:$0xff] %v579
    %584 = vst [vmem:[#allocation2 + $0x19] sm:$0xff] %v580
    %585 = vst [vmem:[#allocation2 + $0x21] sm:$0xff] %v581
    %v586 = vld [vmem:[#allocation2] sm:$0xff]
    %v587 = vld [vmem:[#allocation2 + $0x8] sm:$0xff]
    %v588 = vld [vmem:[#allocation2 + $0x18] sm:$0xff]
    %v589 = vld [vmem:[#allocation2 + $0x20] sm:$0xff]
    %v590 = vpack.c.bf16 %v587, %v586
    %v591 = vpack.c.bf16 %v589, %v588
    %592 = vst [vmem:[#allocation3] sm:$0xff] %v590
    %593 = vst [vmem:[#allocation3 + $0x18] sm:$0xff] %v591
    %v594 = vld [vmem:[#allocation2 + $0x1] sm:$0xff]
    %v595 = vld [vmem:[#allocation2 + $0x9] sm:$0xff]
    %v596 = vld [vmem:[#allocation2 + $0x19] sm:$0xff]
    %v597 = vld [vmem:[#allocation2 + $0x21] sm:$0xff]
    %v598 = vpack.c.bf16 %v595, %v594
    %v599 = vpack.c.bf16 %v597, %v596
    %600 = vst [vmem:[#allocation3 + $0x8] sm:$0xff] %v598
    %601 = vst [vmem:[#allocation3 + $0x20] sm:$0xff] %v599
    %v602 = vld [vmem:[#allocation2 + $0x2] sm:$0xff]
    %v603 = vld [vmem:[#allocation2 + $0xa] sm:$0xff]
    %v604 = vld [vmem:[#allocation2 + $0x1a] sm:$0xff]
    %v605 = vld [vmem:[#allocation2 + $0x22] sm:$0xff]
    %v606 = vpack.c.bf16 %v603, %v602
    %v607 = vpack.c.bf16 %v605, %v604
    %608 = vst [vmem:[#allocation3 + $0x10] sm:$0xff] %v606
    %609 = vst [vmem:[#allocation3 + $0x28] sm:$0xff] %v607
    %v610 = vld [vmem:[#allocation3] sm:$0xff]
    %v611 = vld [vmem:[#allocation3 + $0x8] sm:$0xff]
    %v612 = vld [vmem:[#allocation3 + $0x10] sm:$0xff]
    %v613 = vld [vmem:[#allocation3 + $0x18] sm:$0xff]
    %v614 = vld [vmem:[#allocation3 + $0x20] sm:$0xff]
    %v615 = vld [vmem:[#allocation3 + $0x28] sm:$0xff]
    %v616 = vld [vmem:[#allocation9] sm:$0xf]
    %v617 = vld [vmem:[#allocation9 + $0x4] sm:$0xf]
    %v618 = vld [vmem:[#allocation9 + $0x8] sm:$0xf]
    %v619 = vld [vmem:[#allocation9 + $0xc] sm:$0xf]
    %v620 = vld [vmem:[#allocation9 + $0x10] sm:$0xf]
    %v621 = vld [vmem:[#allocation9 + $0x14] sm:$0xf]
    %v622 = vld [vmem:[#allocation9 + $0x18] sm:$0xf]
    %v623 = vld [vmem:[#allocation9 + $0x1c] sm:$0xf]
    %v624 = vld [vmem:[#allocation9 + $0x20] sm:$0xf]
    %v625 = vld [vmem:[#allocation9 + $0x24] sm:$0xf]
    %v626 = vld [vmem:[#allocation9 + $0x28] sm:$0xf]
    %v627 = vld [vmem:[#allocation9 + $0x2c] sm:$0xf]
    %v628 = vld [vmem:[#allocation9 + $0x30] sm:$0xf]
    %v629 = vld [vmem:[#allocation9 + $0x34] sm:$0xf]
    %v630 = vld [vmem:[#allocation9 + $0x38] sm:$0xf]
    %v631 = vld [vmem:[#allocation9 + $0x3c] sm:$0xf]
    %v632 = vld [vmem:[#allocation9 + $0x40] sm:$0xf]
    %v633 = vld [vmem:[#allocation9 + $0x44] sm:$0xf]
    %v634 = vld [vmem:[#allocation9 + $0x48] sm:$0xf]
    %v635 = vld [vmem:[#allocation9 + $0x4c] sm:$0xf]
    %v636 = vld [vmem:[#allocation9 + $0x50] sm:$0xf]
    %v637 = vld [vmem:[#allocation9 + $0x54] sm:$0xf]
    %v638 = vld [vmem:[#allocation9 + $0x58] sm:$0xf]
    %v639 = vld [vmem:[#allocation9 + $0x5c] sm:$0xf]
    %v640 = vld [vmem:[#allocation9 + $0x60] sm:$0xf]
    %v641 = vld [vmem:[#allocation9 + $0x64] sm:$0xf]
    %v642 = vld [vmem:[#allocation9 + $0x68] sm:$0xf]
    %v643 = vld [vmem:[#allocation9 + $0x6c] sm:$0xf]
    %v644 = vld [vmem:[#allocation9 + $0x70] sm:$0xf]
    %v645 = vld [vmem:[#allocation9 + $0x74] sm:$0xf]
    %v646 = vld [vmem:[#allocation9 + $0x78] sm:$0xf]
    %v647 = vld [vmem:[#allocation9 + $0x7c] sm:$0xf]
    %v648 = vld [vmem:[#allocation9 + $0x80] sm:$0xf]
    %v649 = vld [vmem:[#allocation9 + $0x84] sm:$0xf]
    %v650 = vld [vmem:[#allocation9 + $0x88] sm:$0xf]
    %v651 = vld [vmem:[#allocation9 + $0x8c] sm:$0xf]
    %v652 = vld [vmem:[#allocation9 + $0x90] sm:$0xf]
    %v653 = vld [vmem:[#allocation9 + $0x94] sm:$0xf]
    %v654 = vld [vmem:[#allocation9 + $0x98] sm:$0xf]
    %v655 = vld [vmem:[#allocation9 + $0x9c] sm:$0xf]
    %v656 = vld [vmem:[#allocation9 + $0xa0] sm:$0xf]
    %v657 = vld [vmem:[#allocation9 + $0xa4] sm:$0xf]
    %v658 = vld [vmem:[#allocation9 + $0xa8] sm:$0xf]
    %v659 = vld [vmem:[#allocation9 + $0xac] sm:$0xf]
    %v660 = vld [vmem:[#allocation9 + $0xb0] sm:$0xf]
    %v661 = vld [vmem:[#allocation9 + $0xb4] sm:$0xf]
    %v662 = vld [vmem:[#allocation9 + $0xb8] sm:$0xf]
    %v663 = vld [vmem:[#allocation9 + $0xbc] sm:$0xf]
    %v712 = vunpack.c.l.b16 %v616
    %v713 = vunpack.c.l.b16 %v617
    %v714 = vunpack.c.l.b16 %v618
    %v715 = vunpack.c.l.b16 %v619
    %v716 = vunpack.c.l.b16 %v620
    %v717 = vunpack.c.l.b16 %v621
    %v718 = vunpack.c.l.b16 %v622
    %v719 = vunpack.c.l.b16 %v623
    %v720 = vunpack.c.l.b16 %v624
    %v721 = vunpack.c.l.b16 %v625
    %v722 = vunpack.c.l.b16 %v626
    %v723 = vunpack.c.l.b16 %v627
    %v724 = vunpack.c.l.b16 %v628
    %v725 = vunpack.c.l.b16 %v629
    %v726 = vunpack.c.l.b16 %v630
    %v727 = vunpack.c.l.b16 %v631
    %v728 = vunpack.c.l.b16 %v632
    %v729 = vunpack.c.l.b16 %v633
    %v730 = vunpack.c.l.b16 %v634
    %v731 = vunpack.c.l.b16 %v635
    %v732 = vunpack.c.l.b16 %v636
    %v733 = vunpack.c.l.b16 %v637
    %v734 = vunpack.c.l.b16 %v638
    %v735 = vunpack.c.l.b16 %v639
    %v736 = vunpack.c.l.b16 %v640
    %v737 = vunpack.c.l.b16 %v641
    %v738 = vunpack.c.l.b16 %v642
    %v739 = vunpack.c.l.b16 %v643
    %v740 = vunpack.c.l.b16 %v644
    %v741 = vunpack.c.l.b16 %v645
    %v742 = vunpack.c.l.b16 %v646
    %v743 = vunpack.c.l.b16 %v647
    %v744 = vunpack.c.l.b16 %v648
    %v745 = vunpack.c.l.b16 %v649
    %v746 = vunpack.c.l.b16 %v650
    %v747 = vunpack.c.l.b16 %v651
    %v748 = vunpack.c.l.b16 %v652
    %v749 = vunpack.c.l.b16 %v653
    %v750 = vunpack.c.l.b16 %v654
    %v751 = vunpack.c.l.b16 %v655
    %v752 = vunpack.c.l.b16 %v656
    %v753 = vunpack.c.l.b16 %v657
    %v754 = vunpack.c.l.b16 %v658
    %v755 = vunpack.c.l.b16 %v659
    %v756 = vunpack.c.l.b16 %v660
    %v757 = vunpack.c.l.b16 %v661
    %v758 = vunpack.c.l.b16 %v662
    %v759 = vunpack.c.l.b16 %v663
    %v760 = vpack.c.b16 %v713, %v712
    %v761 = vpack.c.b16 %v715, %v714
    %v762 = vpack.c.b16 %v717, %v716
    %v763 = vpack.c.b16 %v719, %v718
    %v764 = vpack.c.b16 %v721, %v720
    %v765 = vpack.c.b16 %v723, %v722
    %v766 = vpack.c.b16 %v725, %v724
    %v767 = vpack.c.b16 %v727, %v726
    %v768 = vpack.c.b16 %v729, %v728
    %v769 = vpack.c.b16 %v731, %v730
    %v770 = vpack.c.b16 %v733, %v732
    %v771 = vpack.c.b16 %v735, %v734
    %v772 = vpack.c.b16 %v737, %v736
    %v773 = vpack.c.b16 %v739, %v738
    %v774 = vpack.c.b16 %v741, %v740
    %v775 = vpack.c.b16 %v743, %v742
    %v776 = vpack.c.b16 %v745, %v744
    %v777 = vpack.c.b16 %v747, %v746
    %v778 = vpack.c.b16 %v749, %v748
    %v779 = vpack.c.b16 %v751, %v750
    %v780 = vpack.c.b16 %v753, %v752
    %v781 = vpack.c.b16 %v755, %v754
    %v782 = vpack.c.b16 %v757, %v756
    %v783 = vpack.c.b16 %v759, %v758
    %808 = vmatprep.subr.bf16.mxu0 0
    %809 = vmatpush1.bf16.msra.mxu0 %v760
    %810 = vmatprep.subr.bf16.mxu0 0
    %811 = vmatpush1.bf16.msra.mxu0 %v761
    %812 = vmatprep.subr.bf16.mxu0 0
    %813 = vmatpush1.bf16.msra.mxu0 %v762
    %814 = vmatprep.subr.bf16.mxu0 0
    %815 = vmatpush1.bf16.msra.mxu0 %v763
    %816 = vmatprep.subr.bf16.mxu0 0
    %817 = vmatpush1.bf16.msra.mxu0 %v764
    %818 = vmatprep.subr.bf16.mxu0 0
    %819 = vmatpush1.bf16.msra.mxu0 %v765
    %820 = vmatprep.subr.bf16.mxu0 0
    %821 = vmatpush1.bf16.msra.mxu0 %v766
    %822 = vmatprep.subr.bf16.mxu0 0
    %823 = vmatpush1.bf16.msra.mxu0 %v767
    %824 = vmatprep.subr.bf16.mxu0 0
    %825 = vmatpush1.bf16.msra.mxu0 %v768
    %826 = vmatprep.subr.bf16.mxu0 0
    %827 = vmatpush1.bf16.msra.mxu0 %v769
    %828 = vmatprep.subr.bf16.mxu0 0
    %829 = vmatpush1.bf16.msra.mxu0 %v770
    %830 = vmatprep.subr.bf16.mxu0 0
    %831 = vmatpush1.bf16.msra.mxu0 %v771
    %832 = vmatprep.subr.bf16.mxu0 0
    %833 = vmatpush1.bf16.msra.mxu0 %v772
    %834 = vmatprep.subr.bf16.mxu0 0
    %835 = vmatpush1.bf16.msra.mxu0 %v773
    %836 = vmatprep.subr.bf16.mxu0 0
    %837 = vmatpush1.bf16.msra.mxu0 %v774
    %838 = vmatprep.subr.bf16.mxu0 0
    %839 = vmatpush1.bf16.msra.mxu0 %v775
    %840 = vmatprep.mubr.bf16.mxu0 %v611
    %841 = vmatmul.mubr.bf16.gmra.mrb[0].mxu0 %v610
    %v842 = vpop.f32.mrb[0].mxu0
    %v843 = vadd.f32 0.0, %v842
    %v844 = vpop.f32.mrb[0].mxu0
    %v845 = vpop.f32.mrb[0].mxu0
    %v846 = vadd.f32 0.0, %v845
    %v847 = vpop.f32.mrb[0].mxu0
    %848 = vmatprep.mubr.bf16.mxu0 %v614
    %849 = vmatmul.mubr.bf16.gmra.mrb[0].mxu0 %v613
    %v850 = vpop.f32.mrb[0].mxu0
    %v851 = vadd.f32 0.0, %v850
    %v852 = vpop.f32.mrb[0].mxu0
    %v853 = vpop.f32.mrb[0].mxu0
    %v854 = vadd.f32 0.0, %v853
    %v855 = vpop.f32.mrb[0].mxu0
    %856 = vdwg.mxu0
    %857 = vmatprep.subr.bf16.mxu0 0
    %858 = vmatpush1.bf16.msra.mxu0 %v776
    %859 = vmatprep.subr.bf16.mxu0 0
    %860 = vmatpush1.bf16.msra.mxu0 %v777
    %861 = vmatprep.subr.bf16.mxu0 0
    %862 = vmatpush1.bf16.msra.mxu0 %v778
    %863 = vmatprep.subr.bf16.mxu0 0
    %864 = vmatpush1.bf16.msra.mxu0 %v779
    %865 = vmatprep.subr.bf16.mxu0 0
    %866 = vmatpush1.bf16.msra.mxu0 %v780
    %867 = vmatprep.subr.bf16.mxu0 0
    %868 = vmatpush1.bf16.msra.mxu0 %v781
    %869 = vmatprep.subr.bf16.mxu0 0
    %870 = vmatpush1.bf16.msra.mxu0 %v782
    %871 = vmatprep.subr.bf16.mxu0 0
    %872 = vmatpush1.bf16.msra.mxu0 %v783
    %873 = vmatprep.subr.bf16.mxu0 0
    %874 = vmatpush1.bf16.msra.mxu0 0
    %875 = vmatprep.subr.bf16.mxu0 0
    %876 = vmatpush1.bf16.msra.mxu0 0
    %877 = vmatprep.subr.bf16.mxu0 0
    %878 = vmatpush1.bf16.msra.mxu0 0
    %879 = vmatprep.subr.bf16.mxu0 0
    %880 = vmatpush1.bf16.msra.mxu0 0
    %881 = vmatprep.subr.bf16.mxu0 0
    %882 = vmatpush1.bf16.msra.mxu0 0
    %883 = vmatprep.subr.bf16.mxu0 0
    %884 = vmatpush1.bf16.msra.mxu0 0
    %885 = vmatprep.subr.bf16.mxu0 0
    %886 = vmatpush1.bf16.msra.mxu0 0
    %887 = vmatprep.subr.bf16.mxu0 0
    %888 = vmatpush1.bf16.msra.mxu0 0
    %889 = vmatprep.mubr.bf16.mxu0 0
    %890 = vmatmul.mubr.bf16.gmra.mrb[0].mxu0 %v612
    %v891 = vpop.f32.mrb[0].mxu0
    %v892 = vadd.f32 %v843, %v891
    %v893 = vpop.f32.mrb[0].mxu0
    %v894 = vpop.f32.mrb[0].mxu0
    %v895 = vadd.f32 %v846, %v894
    %v896 = vpop.f32.mrb[0].mxu0
    %897 = vmatprep.mubr.bf16.mxu0 0
    %898 = vmatmul.mubr.bf16.gmra.mrb[0].mxu0 %v615
    %v899 = vpop.f32.mrb[0].mxu0
    %v900 = vadd.f32 %v851, %v899
    %v901 = vpop.f32.mrb[0].mxu0
    %v902 = vpop.f32.mrb[0].mxu0
    %v903 = vadd.f32 %v854, %v902
    %v904 = vpop.f32.mrb[0].mxu0
    %905 = vdwg.mxu0
    %v906 = vadd.f32 %v892, %v895
    %v907 = vadd.f32 %v906, %v900
    %v908 = vadd.f32 %v907, %v903
    %v909 = vrot.slane %v908, 4
    %v910 = vadd.f32 %v908, %v909
    %v911 = vrot.slane %v910, 2
    %v912 = vadd.f32 %v910, %v911
    %v913 = vrot.slane %v912, 1
    %v914 = vadd.f32 %v912, %v913
    %v915 = vmul.f32 %v892, %v892
    %v916 = vmul.f32 %v895, %v895
    %v917 = vmul.f32 %v900, %v900
    %v918 = vmul.f32 %v903, %v903
    %v919 = vadd.f32 %v915, %v916
    %v920 = vadd.f32 %v919, %v917
    %v921 = vadd.f32 %v920, %v918
    %v922 = vrot.slane %v921, 4
    %v923 = vadd.f32 %v921, %v922
    %v924 = vrot.slane %v923, 2
    %v925 = vadd.f32 %v923, %v924
    %v926 = vrot.slane %v925, 1
    %v927 = vadd.f32 %v925, %v926
    %v928 = vsel %vm440, %v914, %v927
    %v929 = vld [vmem:[#allocation10] sm:$0xff]
    %v930 = vld [vmem:[#allocation10 + $0x8] sm:$0xff]
    %v931 = vld [vmem:[#allocation10 + $0x10] sm:$0xff]
    %v932 = vld [vmem:[#allocation10 + $0x18] sm:$0xff]
    %v933 = vld [vmem:[#allocation10 + $0x20] sm:$0xff]
    %v934 = vld [vmem:[#allocation10 + $0x28] sm:$0xff]
    %v935 = vld [vmem:[#allocation10 + $0x30] sm:$0xff]
    %v936 = vld [vmem:[#allocation10 + $0x38] sm:$0xff]
    %v937 = vld [vmem:[#allocation10 + $0x40] sm:$0xff]
    %v938 = vld [vmem:[#allocation10 + $0x48] sm:$0xff]
    %v939 = vld [vmem:[#allocation10 + $0x50] sm:$0xff]
    %v940 = vld [vmem:[#allocation10 + $0x58] sm:$0xff]
    %v941 = vld [vmem:[#allocation10 + $0x60] sm:$0xff]
    %v942 = vld [vmem:[#allocation10 + $0x68] sm:$0xff]
    %v943 = vld [vmem:[#allocation10 + $0x70] sm:$0xff]
    %v944 = vld [vmem:[#allocation10 + $0x78] sm:$0xff]
    %945 = vmatprep.subr.mxu0 0.0
    %946 = vmatpush1.msra.mxu0 %v929
    %947 = vmatprep.subr.mxu0 0.0
    %948 = vmatpush1.msra.mxu0 %v930
    %949 = vmatprep.subr.mxu0 0.0
    %950 = vmatpush1.msra.mxu0 %v931
    %951 = vmatprep.subr.mxu0 0.0
    %952 = vmatpush1.msra.mxu0 %v932
    %953 = vmatprep.subr.mxu0 0.0
    %954 = vmatpush1.msra.mxu0 %v933
    %955 = vmatprep.subr.mxu0 0.0
    %956 = vmatpush1.msra.mxu0 %v934
    %957 = vmatprep.subr.mxu0 0.0
    %958 = vmatpush1.msra.mxu0 %v935
    %959 = vmatprep.subr.mxu0 0.0
    %960 = vmatpush1.msra.mxu0 %v936
    %961 = vmatprep.subr.mxu0 0.0
    %962 = vmatpush1.msra.mxu0 %v937
    %963 = vmatprep.subr.mxu0 0.0
    %964 = vmatpush1.msra.mxu0 %v938
    %965 = vmatprep.subr.mxu0 0.0
    %966 = vmatpush1.msra.mxu0 %v939
    %967 = vmatprep.subr.mxu0 0.0
    %968 = vmatpush1.msra.mxu0 %v940
    %969 = vmatprep.subr.mxu0 0.0
    %970 = vmatpush1.msra.mxu0 %v941
    %971 = vmatprep.subr.mxu0 0.0
    %972 = vmatpush1.msra.mxu0 %v942
    %973 = vmatprep.subr.mxu0 0.0
    %974 = vmatpush1.msra.mxu0 %v943
    %975 = vmatprep.subr.mxu0 0.0
    %976 = vmatpush1.msra.mxu0 %v944
    %977 = vmatprep.subr.mxu0 0.0
    %978 = vmatpush1.msra.mxu0 0.0
    %979 = vmatprep.subr.mxu0 0.0
    %980 = vmatpush1.msra.mxu0 0.0
    %981 = vmatprep.subr.mxu0 0.0
    %982 = vmatpush1.msra.mxu0 0.0
    %983 = vmatprep.subr.mxu0 0.0
    %984 = vmatpush1.msra.mxu0 0.0
    %985 = vmatprep.subr.mxu0 0.0
    %986 = vmatpush1.msra.mxu0 0.0
    %987 = vmatprep.subr.mxu0 0.0
    %988 = vmatpush1.msra.mxu0 0.0
    %989 = vmatprep.subr.mxu0 0.0
    %990 = vmatpush1.msra.mxu0 0.0
    %991 = vmatprep.subr.mxu0 0.0
    %992 = vmatpush1.msra.mxu0 0.0
    %993 = vmatprep.subr.mxu0 0.0
    %994 = vmatpush1.msra.mxu0 0.0
    %995 = vmatprep.subr.mxu0 0.0
    %996 = vmatpush1.msra.mxu0 0.0
    %997 = vmatprep.subr.mxu0 0.0
    %998 = vmatpush1.msra.mxu0 0.0
    %999 = vmatprep.subr.mxu0 0.0
    %1000 = vmatpush1.msra.mxu0 0.0
    %1001 = vmatprep.subr.mxu0 0.0
    %1002 = vmatpush1.msra.mxu0 0.0
    %1003 = vmatprep.subr.mxu0 0.0
    %1004 = vmatpush1.msra.mxu0 0.0
    %1005 = vmatprep.subr.mxu0 0.0
    %1006 = vmatpush1.msra.mxu0 0.0
    %1007 = vmatprep.subr.mxu0 0.0
    %1008 = vmatpush1.msra.mxu0 0.0
    %1009 = vmatprep.mubr.f32.mxu0 0.0
    %1010 = vmatmul.mubr.f32.gmra.mrb[0].mxu0 %v928
    %v1011 = vpop.f32.mrb[0].mxu0
    %v1012 = vadd.f32 0.0, %v1011
    %v1013 = vpop.f32.mrb[0].mxu0
    %1014 = vdwg.mxu0
    %v1015 = vmul.f32 %v1012, 0.001953125
    %v1016 = vmul.f32 %v1015, %v1015
    %v1018 = vrot.slane %v1016, 7
    %v1020 = vsub.f32 %v1015, %v1018
    %v1021 = vld [vmem:[%s5] sm:$0x1]
    %v1022 = vadd.f32 %v1020, 1e-05
    %v1023 = vrsqrt.pop %v1022
    %v1026 = vunpack.c.l.s4 1966171168
    %v1027 = vunpack.c.0.s8 %v1026
    %v1028 = vlaneseq
    %v1029 = vshrl.u32 %v1028, 7
    %v1030 = vsub.s32 %v1027, %v1029
    %v1031 = vrot.slane %v1023, %v1030
    %v1032 = vcombine.high %v1031, %v1031
    %v1034 = vunpack.c.l.s4 1966171168
    %v1035 = vunpack.c.0.s8 %v1034
    %v1036 = vlaneseq
    %v1037 = vshrl.u32 %v1036, 7
    %v1038 = vsub.s32 %v1035, %v1037
    %v1039 = vrot.slane %v1032, %v1038
    %v1041 = vmul.f32 %v1021, %v1039
    %v1042 = vld [vmem:[%s6] sm:$0x1]
    %v1043 = vmul.f32 %v1015, %v1041
    %v1044 = vsub.f32 %v1042, %v1043
    %v1046 = vlaneseq
    %v1047 = vshrl.u32 %v1046, 7
    %v1048 = vsub.s32 0, %v1047
    %v1049 = vrot.slane %v1041, %v1048
    %v1051 = vmul.f32 %v892, %v1049
    %v1052 = vmul.f32 %v895, %v1049
    %v1053 = vmul.f32 %v900, %v1049
    %v1054 = vmul.f32 %v903, %v1049
    %v1056 = vlaneseq
    %v1057 = vshrl.u32 %v1056, 7
    %v1058 = vsub.s32 0, %v1057
    %v1059 = vrot.slane %v1044, %v1058
    %v1061 = vadd.f32 %v1051, %v1059
    %v1062 = vadd.f32 %v1052, %v1059
    %v1063 = vadd.f32 %v1053, %v1059
    %v1064 = vadd.f32 %v1054, %v1059
    %v1065 = vld [vmem:[#allocation4] sm:$0xff]
    %v1066 = vld [vmem:[#allocation4 + $0x8] sm:$0xff]
    %v1067 = vld [vmem:[#allocation4 + $0x10] sm:$0xff]
    %v1068 = vld [vmem:[#allocation4 + $0x18] sm:$0xff]
    %v1069 = vadd.f32 %v1061, %v1065
    %v1070 = vadd.f32 %v1062, %v1066
    %v1071 = vadd.f32 %v1063, %v1067
    %v1072 = vadd.f32 %v1064, %v1068
    %v1073 = vmax.f32 %v1069, 0.0
    %v1074 = vmax.f32 %v1070, 0.0
    %v1075 = vmax.f32 %v1071, 0.0
    %v1076 = vmax.f32 %v1072, 0.0
    %1077 = vst [vmem:[#allocation12] sm:$0xff] %v1073
    %1078 = vst [vmem:[#allocation12 + $0x8] sm:$0xff] %v1074
    %1079 = vst [vmem:[#allocation12 + $0x10] sm:$0xff] %v1075
    %1080 = vst [vmem:[#allocation12 + $0x18] sm:$0xff] %v1076
    // Predicated region
    $region50: #{tpu_custom_call.1} parent=1 // pred_check
      _
    $region51: #{tpu_custom_call.1} parent=1 // pred_check_branch
      %1082 = sbr.rel (0) target = $region53
    $region52: #{tpu_custom_call.1} parent=1 // pred_region
      %s1084 = ssub.s32 512, 512
      %1085 = vsyncadd [#allocation6], %s1084
      %s1086 = sshll.u32 [#allocation12], 4
      %s1087 = int_to_ptr.vmem [resolvable:$true] %s1086
      %1092 = dma.vmem_to_hbm [thread:$0]  %s1087, 512, %s8, [#allocation6], 128, 128, 8
    $region53: #{tpu_custom_call.1} parent=1 // pred_fallthru
      _
    // Predicated region
    $region54: #{tpu_custom_call.1} parent=1 // pred_check
      _
    $region55: #{tpu_custom_call.1} parent=1 // pred_check_branch
      %1094 = sbr.rel (0) target = $region57
    $region56: #{tpu_custom_call.1} parent=1 // pred_region
      %1095 = dma.done [#allocation6], 512
    $region57: #{tpu_custom_call.1} parent=1 // pred_fallthru
      _
    %1096 = vsyncpa [#allocation5], 1
    %1097 = vsyncpa [#allocation8], 1
    %1098 = vsyncpa [#allocation11], 1
    %1099 = vsyncpa [#allocation6], 1

</llo_original>
